<compile_context>
chip_gen: v7x
topology: tpu7x:2x2x1
jax: 0.10.0
libtpu: 0.0.40
codegen_flags: <defaults>
</compile_context>

<pallas_src>
import functools

import jax
import jax.numpy as jnp
from jax.experimental import pallas as pl
from jax.experimental.pallas import tpu as pltpu


def _round_up(x, m):
    return ((x + m - 1) // m) * m


# --------------------------------------------------------------------------- #
# Kernel: fused (tb, in) @ (in, 512) matmul + ReLU, then block-diagonal
# (tb, 512) @ (512, OUT_PAD) matmul; only the useful columns are stored.
# --------------------------------------------------------------------------- #
def _polval_kernel(x_ref, w1_ref, b1_ref, w2_ref, b2_ref, pol_ref, val_ref,
                   *, output_dim):
    # Layer 1 (policy1 | value1 fused along N): cast activations to bf16 on the
    # VPU (plenty of slack), bf16 x bf16 MXU matmul with f32 accumulation.
    x = x_ref[...].astype(jnp.bfloat16)
    h = jnp.dot(x, w1_ref[...], preferred_element_type=jnp.float32)
    h = jnp.maximum(h + b1_ref[...], 0.0)          # bias + ReLU in f32 (VPU)

    # Layer 2: one block-diagonal matmul covering policy2 and value2.
    out = jnp.dot(h.astype(w2_ref.dtype), w2_ref[...],
                  preferred_element_type=jnp.float32) + b2_ref[...]

    # Narrow stores: only output_dim+1 useful columns go to HBM instead of the
    # full 128-lane f32 slab (masked vst << extra HBM write bytes here).
    pol_ref[...] = out[:, :output_dim].astype(pol_ref.dtype)
    val_ref[...] = out[:, output_dim:output_dim + 1].astype(val_ref.dtype)


# --------------------------------------------------------------------------- #
# One-time parameter preparation (do NOT redo this per forward call):
# transpose to (in, out), concatenate heads, build block-diagonal layer 2,
# pad the fused layer-2 output axis to a multiple of 128 lanes, cast to bf16.
# --------------------------------------------------------------------------- #
def prepare_params(params):
    input_dim = params["policy1_w"].shape[1]
    hidden = params["policy1_w"].shape[0]
    output_dim = params["policy2_w"].shape[0]
    out_pad = _round_up(output_dim + 1, 128)

    # Fused first layer: (input_dim, 2*hidden)
    w1 = jnp.concatenate([params["policy1_w"].T, params["value1_w"].T], axis=1)
    b1 = jnp.concatenate([params["policy1_b"], params["value1_b"]]).reshape(1, -1)

    # Fused block-diagonal second layer: (2*hidden, out_pad)
    w2 = jnp.zeros((2 * hidden, out_pad), jnp.float32)
    w2 = w2.at[:hidden, :output_dim].set(params["policy2_w"].T)
    w2 = w2.at[hidden:, output_dim:output_dim + 1].set(params["value2_w"].T)
    b2 = jnp.zeros((1, out_pad), jnp.float32)
    b2 = b2.at[0, :output_dim].set(params["policy2_b"])
    b2 = b2.at[0, output_dim].set(params["value2_b"][0])

    return {
        "w1": w1.astype(jnp.bfloat16),
        "b1": b1.astype(jnp.float32),
        "w2": w2.astype(jnp.bfloat16),
        "b2": b2.astype(jnp.float32),
        "input_dim": input_dim,
        "hidden": hidden,
        "output_dim": output_dim,
        "out_pad": out_pad,
    }


# --------------------------------------------------------------------------- #
# Forward wrapper: batch-tiled 1-D "parallel" grid, ragged last block handled
# by Pallas masking (no pad / cast / slice passes in the wrapper).
# --------------------------------------------------------------------------- #
def pol_val_forward(state, prep, *, batch_tile=2048):
    B, input_dim = state.shape
    assert input_dim == prep["input_dim"]
    hidden2 = 2 * prep["hidden"]
    out_pad = prep["out_pad"]
    output_dim = prep["output_dim"]

    # Batch tile: big enough to amortize the ~0.35 us/step pipeline overhead,
    # small enough that h (tb x 512 f32) + double-buffered tiles stay well
    # under v5e's 16 MiB scoped-VMEM default (tb=2048 -> ~5 MiB total).
    tb = min(batch_tile, max(16, _round_up(B, 16)))
    # Give the grid at least 2 steps for medium/large batches so v7x's two
    # TensorCores both get work via the "parallel" axis (no-op on v5e/v6e).
    if B > 256 and pl.cdiv(B, tb) < 2:
        tb = max(16, _round_up(pl.cdiv(B, 2), 16))
    grid = (pl.cdiv(B, tb),)

    flops = 2 * B * (input_dim * hidden2 + hidden2 * out_pad)
    bytes_accessed = (B * input_dim * state.dtype.itemsize   # x
                      + input_dim * hidden2 * 2              # w1 (bf16)
                      + hidden2 * 4                          # b1 (f32)
                      + hidden2 * out_pad * 2                # w2 (bf16)
                      + out_pad * 4                          # b2 (f32)
                      + B * (output_dim + 1) * 4)            # pol + val (f32)

    pol, val = pl.pallas_call(
        functools.partial(_polval_kernel, output_dim=output_dim),
        out_shape=(jax.ShapeDtypeStruct((B, output_dim), jnp.float32),
                   jax.ShapeDtypeStruct((B, 1), jnp.float32)),
        grid=grid,
        in_specs=[
            pl.BlockSpec((tb, input_dim), lambda i: (i, 0)),       # x tile
            pl.BlockSpec((input_dim, hidden2), lambda i: (0, 0)),  # w1 (resident)
            pl.BlockSpec((1, hidden2), lambda i: (0, 0)),          # b1
            pl.BlockSpec((hidden2, out_pad), lambda i: (0, 0)),    # w2 (resident)
            pl.BlockSpec((1, out_pad), lambda i: (0, 0)),          # b2
        ],
        out_specs=(pl.BlockSpec((tb, output_dim), lambda i: (i, 0)),
                   pl.BlockSpec((tb, 1), lambda i: (i, 0))),
        compiler_params=pltpu.CompilerParams(
            dimension_semantics=("parallel",)),
        cost_estimate=pl.CostEstimate(
            flops=flops, transcendentals=0, bytes_accessed=bytes_accessed),
    )(state, prep["w1"], prep["b1"], prep["w2"], prep["b2"])

    return pol, val


# --------------------------------------------------------------------------- #
# Init / references
# --------------------------------------------------------------------------- #
def init_params(key, input_dim, output_dim, hidden=256):
    """Deterministic init mimicking PyTorch's default U(-1/sqrt(fan_in), +)."""
    ks = jax.random.split(key, 8)

    def lin(kw, kb, out_f, in_f):
        bound = 1.0 / jnp.sqrt(in_f)
        w = jax.random.uniform(kw, (out_f, in_f), jnp.float32, -bound, bound)
        b = jax.random.uniform(kb, (out_f,), jnp.float32, -bound, bound)
        return w, b

    p1w, p1b = lin(ks[0], ks[1], hidden, input_dim)
    p2w, p2b = lin(ks[2], ks[3], output_dim, hidden)
    v1w, v1b = lin(ks[4], ks[5], hidden, input_dim)
    v2w, v2b = lin(ks[6], ks[7], 1, hidden)
    return {
        "policy1_w": p1w, "policy1_b": p1b,
        "policy2_w": p2w, "policy2_b": p2b,
        "value1_w": v1w, "value1_b": v1b,
        "value2_w": v2w, "value2_b": v2b,
    }


def _reference_f32(state, params):
    def linear(x, w, b):
        return x @ w.T + b
    hp = jax.nn.relu(linear(state, params["policy1_w"], params["policy1_b"]))
    pol = linear(hp, params["policy2_w"], params["policy2_b"])
    hv = jax.nn.relu(linear(state, params["value1_w"], params["value1_b"]))
    val = linear(hv, params["value2_w"], params["value2_b"])
    return pol, val


def _reference_bf16(state, params):
    """Same math as the kernel: bf16 matmul operands, f32 accumulate/VPU."""
    def linear(x, w, b):
        return jnp.dot(x.astype(jnp.bfloat16), w.T.astype(jnp.bfloat16),
                       preferred_element_type=jnp.float32) + b
    hp = jax.nn.relu(linear(state, params["policy1_w"], params["policy1_b"]))
    pol = linear(hp, params["policy2_w"], params["policy2_b"])
    hv = jax.nn.relu(linear(state, params["value1_w"], params["value1_b"]))
    val = linear(hv, params["value2_w"], params["value2_b"])
    return pol, val


if __name__ == "__main__":
    key = jax.random.PRNGKey(0)
    k_param, k_state, k_state2 = jax.random.split(key, 3)

    batch, input_dim, output_dim = 2, 16, 8
    params = init_params(k_param, input_dim, output_dim)
    prep = prepare_params(params)
    state = jax.random.normal(k_state, (batch, input_dim), jnp.float32)

    pol, val = pol_val_forward(state, prep)
    jax.block_until_ready((pol, val))
    assert pol.shape == (batch, output_dim) and val.shape == (batch, 1)

    # Tight check vs. a reference using identical bf16-matmul / f32-accumulate math.
    pol_b, val_b = _reference_bf16(state, params)
    assert jnp.allclose(pol, pol_b, atol=2e-3, rtol=2e-3)
    assert jnp.allclose(val, val_b, atol=2e-3, rtol=2e-3)

    # Loose check vs. the full-f32 PyTorch-equivalent forward.
    pol_f, val_f = _reference_f32(state, params)
    assert jnp.allclose(pol, pol_f, atol=5e-2, rtol=5e-2)
    assert jnp.allclose(val, val_f, atol=5e-2, rtol=5e-2)

    # Multi-step grid + ragged last block smoke test (exercises the cdiv grid
    # and the >=2-step split for megacore).
    batch2 = 300
    state2 = jax.random.normal(k_state2, (batch2, input_dim), jnp.float32)
    pol2, val2 = pol_val_forward(state2, prep)
    jax.block_until_ready((pol2, val2))
    assert pol2.shape == (batch2, output_dim) and val2.shape == (batch2, 1)
    pol2_b, val2_b = _reference_bf16(state2, params)
    assert jnp.allclose(pol2, pol2_b, atol=2e-3, rtol=2e-3)
    assert jnp.allclose(val2, val2_b, atol=2e-3, rtol=2e-3)

    print("KERNEL_OK")
</pallas_src>

<mosaic_0001>
module attributes {stable_mosaic.version = 11 : i64} {
  func.func @_polval_kernel(%arg0: i32, %arg1: memref<16x16xf32, #tpu.memory_space<vmem>>, %arg2: memref<16x512xbf16, #tpu.memory_space<vmem>>, %arg3: memref<1x512xf32, #tpu.memory_space<vmem>>, %arg4: memref<512x128xbf16, #tpu.memory_space<vmem>>, %arg5: memref<1x128xf32, #tpu.memory_space<vmem>>, %arg6: memref<16x8xf32, #tpu.memory_space<vmem>>, %arg7: memref<16x1xf32, #tpu.memory_space<vmem>>) attributes {dimension_semantics = [#tpu.dimension_semantics<parallel>], iteration_bounds = array<i64: 1>, scalar_prefetch = 0 : i64, scratch_operands = 0 : i64, tpu.core_type = #tpu.core_type<tc>, window_params = [{transform_indices = @transform_0, window_bounds = array<i64: 16, 16>}, {pipeline_mode = #tpu.pipeline_mode<synchronous>, transform_indices = @transform_1, window_bounds = array<i64: 16, 512>}, {pipeline_mode = #tpu.pipeline_mode<synchronous>, transform_indices = @transform_2, window_bounds = array<i64: 1, 512>}, {pipeline_mode = #tpu.pipeline_mode<synchronous>, transform_indices = @transform_3, window_bounds = array<i64: 512, 128>}, {pipeline_mode = #tpu.pipeline_mode<synchronous>, transform_indices = @transform_4, window_bounds = array<i64: 1, 128>}, {transform_indices = @transform_5, window_bounds = array<i64: 16, 8>}, {transform_indices = @transform_6, window_bounds = array<i64: 16, 1>}]} {
    %c0 = arith.constant 0 : index
    %c0_0 = arith.constant 0 : index
    %0 = vector.load %arg1[%c0, %c0_0] : memref<16x16xf32, #tpu.memory_space<vmem>>, vector<16x16xf32>
    %1 = arith.truncf %0 : vector<16x16xf32> to vector<16x16xbf16>
    %c0_1 = arith.constant 0 : index
    %c0_2 = arith.constant 0 : index
    %2 = vector.load %arg2[%c0_1, %c0_2] : memref<16x512xbf16, #tpu.memory_space<vmem>>, vector<16x512xbf16>
    %cst = arith.constant dense<0.000000e+00> : vector<16x512xf32>
    %3 = tpu.matmul %1, %2, %cst {dimension_numbers = #tpu.dot_dimension_numbers<[1], [0], [0], [1], [0, 0, 1, 1], [], []>} : vector<16x16xbf16>, vector<16x512xbf16>, vector<16x512xf32> -> vector<16x512xf32>
    %c0_3 = arith.constant 0 : index
    %c0_4 = arith.constant 0 : index
    %4 = vector.load %arg3[%c0_3, %c0_4] : memref<1x512xf32, #tpu.memory_space<vmem>>, vector<1x512xf32>
    %5 = vector.broadcast %4 : vector<1x512xf32> to vector<16x512xf32>
    %6 = arith.addf %3, %5 : vector<16x512xf32>
    %cst_5 = arith.constant 0.000000e+00 : f32
    %7 = vector.broadcast %cst_5 : f32 to vector<16x512xf32>
    %8 = arith.maximumf %6, %7 : vector<16x512xf32>
    %9 = arith.truncf %8 : vector<16x512xf32> to vector<16x512xbf16>
    %c0_6 = arith.constant 0 : index
    %c0_7 = arith.constant 0 : index
    %10 = vector.load %arg4[%c0_6, %c0_7] : memref<512x128xbf16, #tpu.memory_space<vmem>>, vector<512x128xbf16>
    %cst_8 = arith.constant dense<0.000000e+00> : vector<16x128xf32>
    %11 = tpu.matmul %9, %10, %cst_8 {dimension_numbers = #tpu.dot_dimension_numbers<[1], [0], [0], [1], [0, 0, 1, 1], [], []>} : vector<16x512xbf16>, vector<512x128xbf16>, vector<16x128xf32> -> vector<16x128xf32>
    %c0_9 = arith.constant 0 : index
    %c0_10 = arith.constant 0 : index
    %12 = vector.load %arg5[%c0_9, %c0_10] : memref<1x128xf32, #tpu.memory_space<vmem>>, vector<1x128xf32>
    %13 = vector.broadcast %12 : vector<1x128xf32> to vector<16x128xf32>
    %14 = arith.addf %11, %13 : vector<16x128xf32>
    %15 = vector.extract_strided_slice %14 {offsets = [0, 0], sizes = [16, 8], strides = [1, 1]} : vector<16x128xf32> to vector<16x8xf32>
    %c0_11 = arith.constant 0 : index
    %c0_12 = arith.constant 0 : index
    %16 = vector.load %arg6[%c0_11, %c0_12] : memref<16x8xf32, #tpu.memory_space<vmem>>, vector<16x8xf32>
    tpu.vector_store %arg6[%c0_11, %c0_12], %15 {strides = array<i32>} : memref<16x8xf32, #tpu.memory_space<vmem>>, vector<16x8xf32>,
    %17 = vector.extract_strided_slice %14 {offsets = [0, 8], sizes = [16, 1], strides = [1, 1]} : vector<16x128xf32> to vector<16x1xf32>
    %c0_13 = arith.constant 0 : index
    %c0_14 = arith.constant 0 : index
    %18 = vector.load %arg7[%c0_13, %c0_14] : memref<16x1xf32, #tpu.memory_space<vmem>>, vector<16x1xf32>
    tpu.vector_store %arg7[%c0_13, %c0_14], %17 {strides = array<i32>} : memref<16x1xf32, #tpu.memory_space<vmem>>, vector<16x1xf32>,
    return
  }
  func.func @transform_0(%arg0: i32) -> (i32, i32) {
    %c0_i32 = arith.constant 0 : i32
    %c0_i32_0 = arith.constant 0 : i32
    return %arg0, %c0_i32 : i32, i32
  }
  func.func @transform_1(%arg0: i32) -> (i32, i32) {
    %c0_i32 = arith.constant 0 : i32
    %c0_i32_0 = arith.constant 0 : i32
    %c0_i32_1 = arith.constant 0 : i32
    return %c0_i32, %c0_i32_0 : i32, i32
  }
  func.func @transform_2(%arg0: i32) -> (i32, i32) {
    %c0_i32 = arith.constant 0 : i32
    %c0_i32_0 = arith.constant 0 : i32
    %c0_i32_1 = arith.constant 0 : i32
    return %c0_i32, %c0_i32_0 : i32, i32
  }
  func.func @transform_3(%arg0: i32) -> (i32, i32) {
    %c0_i32 = arith.constant 0 : i32
    %c0_i32_0 = arith.constant 0 : i32
    %c0_i32_1 = arith.constant 0 : i32
    return %c0_i32, %c0_i32_0 : i32, i32
  }
  func.func @transform_4(%arg0: i32) -> (i32, i32) {
    %c0_i32 = arith.constant 0 : i32
    %c0_i32_0 = arith.constant 0 : i32
    %c0_i32_1 = arith.constant 0 : i32
    return %c0_i32, %c0_i32_0 : i32, i32
  }
  func.func @transform_5(%arg0: i32) -> (i32, i32) {
    %c0_i32 = arith.constant 0 : i32
    %c0_i32_0 = arith.constant 0 : i32
    return %arg0, %c0_i32 : i32, i32
  }
  func.func @transform_6(%arg0: i32) -> (i32, i32) {
    %c0_i32 = arith.constant 0 : i32
    %c0_i32_0 = arith.constant 0 : i32
    return %arg0, %c0_i32 : i32, i32
  }
}

</mosaic_0001>

<llo_original>
// kernel: tpu_custom_call.1
$region0: #{tpu_custom_call.1}
  #allocation0 [shape = 'u32[]', space=smem, size = 0x4, offset = 0x4, fixed_abs, tag = 'smem constant byte address 0x4 - core index']
  #allocation1 [shape = 'u32[144,128]{1,0:T(1,128)}', space=vmem, size = 0x12000, scoped, tag = 'internal scratch']
  %s0 = inlined_call_operand.hbm [shape: f32[2,16], index: 0, kind: input, shape index: {}]
  %s1 = inlined_call_operand.hbm [shape: bf16[16,512], index: 1, kind: input, shape index: {}]
  %s2 = inlined_call_operand.vmem [shape: f32[1,512], index: 2, kind: input, shape index: {}]
  %s3 = inlined_call_operand.hbm [shape: bf16[512,128], index: 3, kind: input, shape index: {}]
  %s4 = inlined_call_operand.vmem [shape: f32[1,128], index: 4, kind: input, shape index: {}]
  %s5 = inlined_call_operand.hbm [shape: f32[2,8], index: 5, kind: output, shape index: {0}]
  %s6 = inlined_call_operand.vmem [shape: f32[2,1], index: 6, kind: output, shape index: {1}]
  %7 = xla_tuple %s5, %s6
  %s8 = sld [smem:[#allocation0]]
  $region80: #{tpu_custom_call.1} parent=0
    _
  %s10 = ssub.s32 1, %s8
  %s11 = scalar_select 0, %s10, %s8
  $region1: #{tpu_custom_call.1} parent=0
    #allocation2 [shape = 'u8[8192]{0}', space=vmem, size = 0x2000, scoped, tag = 'input window, operand 0, single buffered']
    #allocation3 [shape = 's32[1]{0}', space=sflag, size = 0x4, scoped, tag = 'scoped memory for tpu_custom_call.1']
    #allocation4 [shape = 's32[1]{0}', space=sflag, size = 0x4, scoped, tag = 'scoped memory for tpu_custom_call.1']
    #allocation5 [shape = 'u8[16384]{0}', space=vmem, size = 0x4000, scoped, tag = 'input window, operand 1, single buffered']
    #allocation6 [shape = 's32[1]{0}', space=sflag, size = 0x4, scoped, tag = 'scoped memory for tpu_custom_call.1']
    #allocation7 [shape = 'u8[131072]{0}', space=vmem, size = 0x20000, scoped, tag = 'input window, operand 3, single buffered']
    #allocation8 [shape = 'u8[8192]{0}', space=vmem, size = 0x2000, scoped, tag = 'output window, operand 0, single buffered']
    #allocation9 [shape = 'u8[8192]{0}', space=vmem, size = 0x2000, scoped, tag = 'output window, operand 1, single buffered']
    %12 = vsyncpa [#allocation3], 0
    %13 = vsyncpa [#allocation6], 0
    %14 = vsyncpa [#allocation4], 0
    // Predicated region
    $region2: #{tpu_custom_call.1} parent=1 // pred_check
      _
    $region3: #{tpu_custom_call.1} parent=1 // pred_check_branch
      %16 = sbr.rel (0) target = $region5
    $region4: #{tpu_custom_call.1} parent=1 // pred_region
      %s18 = ssub.s32 256, 32
      %19 = vsyncadd [#allocation3], %s18
      %s20 = sshll.u32 [#allocation2], 4
      %s21 = int_to_ptr.vmem [resolvable:$true] %s20
      %26 = dma.hbm_to_vmem [thread:$0]  %s0, 32, %s21, [#allocation3], 32, 32, 2
    $region5: #{tpu_custom_call.1} parent=1 // pred_fallthru
      _
    // Predicated region
    $region6: #{tpu_custom_call.1} parent=1 // pred_check
      _
    $region7: #{tpu_custom_call.1} parent=1 // pred_check_branch
      %28 = sbr.rel (0) target = $region9
    $region8: #{tpu_custom_call.1} parent=1 // pred_region
      %s30 = ssub.s32 512, 512
      %31 = vsyncadd [#allocation6], %s30
      %s32 = sshll.u32 [#allocation5], 4
      %s33 = int_to_ptr.vmem [resolvable:$true] %s32
      %38 = dma.hbm_to_vmem [thread:$0]  %s1, 512, %s33, [#allocation6], 256, 256, 16
    $region9: #{tpu_custom_call.1} parent=1 // pred_fallthru
      _
    // Predicated region
    $region10: #{tpu_custom_call.1} parent=1 // pred_check
      _
    $region11: #{tpu_custom_call.1} parent=1 // pred_check_branch
      %40 = sbr.rel (0) target = $region13
    $region12: #{tpu_custom_call.1} parent=1 // pred_region
      _
    $region13: #{tpu_custom_call.1} parent=1 // pred_fallthru
      _
    // Predicated region
    $region14: #{tpu_custom_call.1} parent=1 // pred_check
      _
    $region15: #{tpu_custom_call.1} parent=1 // pred_check_branch
      %42 = sbr.rel (0) target = $region17
    $region16: #{tpu_custom_call.1} parent=1 // pred_region
      %s44 = ssub.s32 4096, 4096
      %45 = vsyncadd [#allocation6], %s44
      %s46 = sshll.u32 [#allocation7], 4
      %s47 = int_to_ptr.vmem [resolvable:$true] %s46
      %52 = dma.hbm_to_vmem [thread:$0]  %s3, 4096, %s47, [#allocation6], 64, 64, 4
    $region17: #{tpu_custom_call.1} parent=1 // pred_fallthru
      _
    // Predicated region
    $region18: #{tpu_custom_call.1} parent=1 // pred_check
      _
    $region19: #{tpu_custom_call.1} parent=1 // pred_check_branch
      %54 = sbr.rel (0) target = $region21
    $region20: #{tpu_custom_call.1} parent=1 // pred_region
      _
    $region21: #{tpu_custom_call.1} parent=1 // pred_fallthru
      _
    // Predicated region
    $region22: #{tpu_custom_call.1} parent=1 // pred_check
      _
    $region23: #{tpu_custom_call.1} parent=1 // pred_check_branch
      %56 = sbr.rel (0) target = $region25
    $region24: #{tpu_custom_call.1} parent=1 // pred_region
      %57 = dma.done [#allocation3], 256
    $region25: #{tpu_custom_call.1} parent=1 // pred_fallthru
      _
    // Predicated region
    $region26: #{tpu_custom_call.1} parent=1 // pred_check
      _
    $region27: #{tpu_custom_call.1} parent=1 // pred_check_branch
      %59 = sbr.rel (0) target = $region29
    $region28: #{tpu_custom_call.1} parent=1 // pred_region
      %60 = dma.done [#allocation6], 512
    $region29: #{tpu_custom_call.1} parent=1 // pred_fallthru
      _
    // Predicated region
    $region30: #{tpu_custom_call.1} parent=1 // pred_check
      _
    $region31: #{tpu_custom_call.1} parent=1 // pred_check_branch
      %62 = sbr.rel (0) target = $region33
    $region32: #{tpu_custom_call.1} parent=1 // pred_region
      %63 = dma.done [#allocation6], 4096
    $region33: #{tpu_custom_call.1} parent=1 // pred_fallthru
      _
    %v65 = vld [vmem:[#allocation2] sm:$0xff]
    %v66 = vld [vmem:[#allocation2 + $0x8] sm:$0xff]
    %v67 = vpack.c.bf16 %v66, %v65
    %v68 = vld [vmem:[#allocation5] sm:$0xff]
    %v69 = vld [vmem:[#allocation5 + $0x8] sm:$0xff]
    %v70 = vld [vmem:[#allocation5 + $0x10] sm:$0xff]
    %v71 = vld [vmem:[#allocation5 + $0x18] sm:$0xff]
    %v72 = vld [vmem:[%s2] sm:$0xf]
    %v74 = vlaneseq
    %v75 = vshrl.u32 %v74, 7
    %v76 = vsub.s32 0, %v75
    %v77 = vrot.slane %v72, %v76
    %v78 = vlaneseq
    %v79 = vshrl.u32 %v78, 7
    %v80 = vsub.s32 1, %v79
    %v81 = vrot.slane %v72, %v80
    %v82 = vlaneseq
    %v83 = vshrl.u32 %v82, 7
    %v84 = vsub.s32 2, %v83
    %v85 = vrot.slane %v72, %v84
    %v86 = vlaneseq
    %v87 = vshrl.u32 %v86, 7
    %v88 = vsub.s32 3, %v87
    %v89 = vrot.slane %v72, %v88
    %v98 = vunpack.c.l.b16 %v68
    %v99 = vunpack.c.h.b16 %v68
    %v100 = vunpack.c.l.b16 %v69
    %v101 = vunpack.c.h.b16 %v69
    %v102 = vunpack.c.l.b16 %v70
    %v103 = vunpack.c.h.b16 %v70
    %v104 = vunpack.c.l.b16 %v71
    %v105 = vunpack.c.h.b16 %v71
    %v106 = vpack.c.b16 %v102, %v98
    %v107 = vpack.c.b16 %v103, %v99
    %v108 = vpack.c.b16 %v104, %v100
    %v109 = vpack.c.b16 %v105, %v101
    %vm114 = vcmask 130048
    %v116 = vsel %vm114, %v67, 0
    %118 = vmatprep.subr.bf16.mxu0 %v107
    %119 = vmatpush1.bf16.msra.mxu0 %v106
    %120 = vmatprep.subr.bf16.mxu0 0
    %121 = vmatpush1.bf16.msra.mxu0 0
    %122 = vmatprep.subr.bf16.mxu0 0
    %123 = vmatpush1.bf16.msra.mxu0 0
    %124 = vmatprep.subr.bf16.mxu0 0
    %125 = vmatpush1.bf16.msra.mxu0 0
    %126 = vmatprep.subr.bf16.mxu0 0
    %127 = vmatpush1.bf16.msra.mxu0 0
    %128 = vmatprep.subr.bf16.mxu0 0
    %129 = vmatpush1.bf16.msra.mxu0 0
    %130 = vmatprep.subr.bf16.mxu0 0
    %131 = vmatpush1.bf16.msra.mxu0 0
    %132 = vmatprep.subr.bf16.mxu0 0
    %133 = vmatpush1.bf16.msra.mxu0 0
    %134 = vmatprep.subr.bf16.mxu0 0
    %135 = vmatpush1.bf16.msra.mxu0 0
    %136 = vmatprep.subr.bf16.mxu0 0
    %137 = vmatpush1.bf16.msra.mxu0 0
    %138 = vmatprep.subr.bf16.mxu0 0
    %139 = vmatpush1.bf16.msra.mxu0 0
    %140 = vmatprep.subr.bf16.mxu0 0
    %141 = vmatpush1.bf16.msra.mxu0 0
    %142 = vmatprep.subr.bf16.mxu0 0
    %143 = vmatpush1.bf16.msra.mxu0 0
    %144 = vmatprep.subr.bf16.mxu0 0
    %145 = vmatpush1.bf16.msra.mxu0 0
    %146 = vmatprep.subr.bf16.mxu0 0
    %147 = vmatpush1.bf16.msra.mxu0 0
    %148 = vmatprep.subr.bf16.mxu0 0
    %149 = vmatpush1.bf16.msra.mxu0 0
    %150 = vmatprep.mubr.bf16.mxu0 0
    %151 = vmatmul.mubr.bf16.gmra.mrb[0].mxu0 %v116
    %v152 = vpop.f32.mrb[0].mxu0
    %v153 = vadd.f32 %v77, %v152
    %v154 = vpop.f32.mrb[0].mxu0
    %v155 = vadd.f32 %v81, %v154
    %v156 = vpop.f32.mrb[0].mxu0
    %v157 = vadd.f32 %v77, %v156
    %v158 = vpop.f32.mrb[0].mxu0
    %v159 = vadd.f32 %v81, %v158
    %160 = vdwg.mxu0
    %161 = vmatprep.subr.bf16.mxu0 %v109
    %162 = vmatpush1.bf16.msra.mxu0 %v108
    %163 = vmatprep.subr.bf16.mxu0 0
    %164 = vmatpush1.bf16.msra.mxu0 0
    %165 = vmatprep.subr.bf16.mxu0 0
    %166 = vmatpush1.bf16.msra.mxu0 0
    %167 = vmatprep.subr.bf16.mxu0 0
    %168 = vmatpush1.bf16.msra.mxu0 0
    %169 = vmatprep.subr.bf16.mxu0 0
    %170 = vmatpush1.bf16.msra.mxu0 0
    %171 = vmatprep.subr.bf16.mxu0 0
    %172 = vmatpush1.bf16.msra.mxu0 0
    %173 = vmatprep.subr.bf16.mxu0 0
    %174 = vmatpush1.bf16.msra.mxu0 0
    %175 = vmatprep.subr.bf16.mxu0 0
    %176 = vmatpush1.bf16.msra.mxu0 0
    %177 = vmatprep.subr.bf16.mxu0 0
    %178 = vmatpush1.bf16.msra.mxu0 0
    %179 = vmatprep.subr.bf16.mxu0 0
    %180 = vmatpush1.bf16.msra.mxu0 0
    %181 = vmatprep.subr.bf16.mxu0 0
    %182 = vmatpush1.bf16.msra.mxu0 0
    %183 = vmatprep.subr.bf16.mxu0 0
    %184 = vmatpush1.bf16.msra.mxu0 0
    %185 = vmatprep.subr.bf16.mxu0 0
    %186 = vmatpush1.bf16.msra.mxu0 0
    %187 = vmatprep.subr.bf16.mxu0 0
    %188 = vmatpush1.bf16.msra.mxu0 0
    %189 = vmatprep.subr.bf16.mxu0 0
    %190 = vmatpush1.bf16.msra.mxu0 0
    %191 = vmatprep.subr.bf16.mxu0 0
    %192 = vmatpush1.bf16.msra.mxu0 0
    %193 = vmatprep.mubr.bf16.mxu0 0
    %194 = vmatmul.mubr.bf16.gmra.mrb[0].mxu0 %v116
    %v195 = vpop.f32.mrb[0].mxu0
    %v196 = vadd.f32 %v85, %v195
    %v197 = vpop.f32.mrb[0].mxu0
    %v198 = vadd.f32 %v89, %v197
    %v199 = vpop.f32.mrb[0].mxu0
    %v200 = vadd.f32 %v85, %v199
    %v201 = vpop.f32.mrb[0].mxu0
    %v202 = vadd.f32 %v89, %v201
    %203 = vdwg.mxu0
    %v204 = vmax.f32 %v153, 0.0
    %v205 = vmax.f32 %v155, 0.0
    %v206 = vmax.f32 %v196, 0.0
    %v207 = vmax.f32 %v198, 0.0
    %v208 = vmax.f32 %v157, 0.0
    %v209 = vmax.f32 %v159, 0.0
    %v210 = vmax.f32 %v200, 0.0
    %v211 = vmax.f32 %v202, 0.0
    %v212 = vpack.c.bf16 %v208, %v204
    %v213 = vpack.c.bf16 %v209, %v205
    %v214 = vpack.c.bf16 %v210, %v206
    %v215 = vpack.c.bf16 %v211, %v207
    %v216 = vld [vmem:[#allocation7] sm:$0xf]
    %v217 = vld [vmem:[#allocation7 + $0x4] sm:$0xf]
    %v218 = vld [vmem:[#allocation7 + $0x8] sm:$0xf]
    %v219 = vld [vmem:[#allocation7 + $0xc] sm:$0xf]
    %v220 = vld [vmem:[#allocation7 + $0x10] sm:$0xf]
    %v221 = vld [vmem:[#allocation7 + $0x14] sm:$0xf]
    %v222 = vld [vmem:[#allocation7 + $0x18] sm:$0xf]
    %v223 = vld [vmem:[#allocation7 + $0x1c] sm:$0xf]
    %v224 = vld [vmem:[#allocation7 + $0x20] sm:$0xf]
    %v225 = vld [vmem:[#allocation7 + $0x24] sm:$0xf]
    %v226 = vld [vmem:[#allocation7 + $0x28] sm:$0xf]
    %v227 = vld [vmem:[#allocation7 + $0x2c] sm:$0xf]
    %v228 = vld [vmem:[#allocation7 + $0x30] sm:$0xf]
    %v229 = vld [vmem:[#allocation7 + $0x34] sm:$0xf]
    %v230 = vld [vmem:[#allocation7 + $0x38] sm:$0xf]
    %v231 = vld [vmem:[#allocation7 + $0x3c] sm:$0xf]
    %v232 = vld [vmem:[#allocation7 + $0x40] sm:$0xf]
    %v233 = vld [vmem:[#allocation7 + $0x44] sm:$0xf]
    %v234 = vld [vmem:[#allocation7 + $0x48] sm:$0xf]
    %v235 = vld [vmem:[#allocation7 + $0x4c] sm:$0xf]
    %v236 = vld [vmem:[#allocation7 + $0x50] sm:$0xf]
    %v237 = vld [vmem:[#allocation7 + $0x54] sm:$0xf]
    %v238 = vld [vmem:[#allocation7 + $0x58] sm:$0xf]
    %v239 = vld [vmem:[#allocation7 + $0x5c] sm:$0xf]
    %v240 = vld [vmem:[#allocation7 + $0x60] sm:$0xf]
    %v241 = vld [vmem:[#allocation7 + $0x64] sm:$0xf]
    %v242 = vld [vmem:[#allocation7 + $0x68] sm:$0xf]
    %v243 = vld [vmem:[#allocation7 + $0x6c] sm:$0xf]
    %v244 = vld [vmem:[#allocation7 + $0x70] sm:$0xf]
    %v245 = vld [vmem:[#allocation7 + $0x74] sm:$0xf]
    %v246 = vld [vmem:[#allocation7 + $0x78] sm:$0xf]
    %v247 = vld [vmem:[#allocation7 + $0x7c] sm:$0xf]
    %v248 = vld [vmem:[#allocation7 + $0x80] sm:$0xf]
    %v249 = vld [vmem:[#allocation7 + $0x84] sm:$0xf]
    %v250 = vld [vmem:[#allocation7 + $0x88] sm:$0xf]
    %v251 = vld [vmem:[#allocation7 + $0x8c] sm:$0xf]
    %v252 = vld [vmem:[#allocation7 + $0x90] sm:$0xf]
    %v253 = vld [vmem:[#allocation7 + $0x94] sm:$0xf]
    %v254 = vld [vmem:[#allocation7 + $0x98] sm:$0xf]
    %v255 = vld [vmem:[#allocation7 + $0x9c] sm:$0xf]
    %v256 = vld [vmem:[#allocation7 + $0xa0] sm:$0xf]
    %v257 = vld [vmem:[#allocation7 + $0xa4] sm:$0xf]
    %v258 = vld [vmem:[#allocation7 + $0xa8] sm:$0xf]
    %v259 = vld [vmem:[#allocation7 + $0xac] sm:$0xf]
    %v260 = vld [vmem:[#allocation7 + $0xb0] sm:$0xf]
    %v261 = vld [vmem:[#allocation7 + $0xb4] sm:$0xf]
    %v262 = vld [vmem:[#allocation7 + $0xb8] sm:$0xf]
    %v263 = vld [vmem:[#allocation7 + $0xbc] sm:$0xf]
    %v264 = vld [vmem:[#allocation7 + $0xc0] sm:$0xf]
    %v265 = vld [vmem:[#allocation7 + $0xc4] sm:$0xf]
    %v266 = vld [vmem:[#allocation7 + $0xc8] sm:$0xf]
    %v267 = vld [vmem:[#allocation7 + $0xcc] sm:$0xf]
    %v268 = vld [vmem:[#allocation7 + $0xd0] sm:$0xf]
    %v269 = vld [vmem:[#allocation7 + $0xd4] sm:$0xf]
    %v270 = vld [vmem:[#allocation7 + $0xd8] sm:$0xf]
    %v271 = vld [vmem:[#allocation7 + $0xdc] sm:$0xf]
    %v272 = vld [vmem:[#allocation7 + $0xe0] sm:$0xf]
    %v273 = vld [vmem:[#allocation7 + $0xe4] sm:$0xf]
    %v274 = vld [vmem:[#allocation7 + $0xe8] sm:$0xf]
    %v275 = vld [vmem:[#allocation7 + $0xec] sm:$0xf]
    %v276 = vld [vmem:[#allocation7 + $0xf0] sm:$0xf]
    %v277 = vld [vmem:[#allocation7 + $0xf4] sm:$0xf]
    %v278 = vld [vmem:[#allocation7 + $0xf8] sm:$0xf]
    %v279 = vld [vmem:[#allocation7 + $0xfc] sm:$0xf]
    %v280 = vld [vmem:[%s4] sm:$0x1]
    %v282 = vlaneseq
    %v283 = vshrl.u32 %v282, 7
    %v284 = vsub.s32 0, %v283
    %v285 = vrot.slane %v280, %v284
    %v351 = vunpack.c.l.b16 %v216
    %v352 = vunpack.c.l.b16 %v217
    %v353 = vunpack.c.l.b16 %v218
    %v354 = vunpack.c.l.b16 %v219
    %v355 = vunpack.c.l.b16 %v220
    %v356 = vunpack.c.l.b16 %v221
    %v357 = vunpack.c.l.b16 %v222
    %v358 = vunpack.c.l.b16 %v223
    %v359 = vunpack.c.l.b16 %v224
    %v360 = vunpack.c.l.b16 %v225
    %v361 = vunpack.c.l.b16 %v226
    %v362 = vunpack.c.l.b16 %v227
    %v363 = vunpack.c.l.b16 %v228
    %v364 = vunpack.c.l.b16 %v229
    %v365 = vunpack.c.l.b16 %v230
    %v366 = vunpack.c.l.b16 %v231
    %v367 = vunpack.c.l.b16 %v232
    %v368 = vunpack.c.l.b16 %v233
    %v369 = vunpack.c.l.b16 %v234
    %v370 = vunpack.c.l.b16 %v235
    %v371 = vunpack.c.l.b16 %v236
    %v372 = vunpack.c.l.b16 %v237
    %v373 = vunpack.c.l.b16 %v238
    %v374 = vunpack.c.l.b16 %v239
    %v375 = vunpack.c.l.b16 %v240
    %v376 = vunpack.c.l.b16 %v241
    %v377 = vunpack.c.l.b16 %v242
    %v378 = vunpack.c.l.b16 %v243
    %v379 = vunpack.c.l.b16 %v244
    %v380 = vunpack.c.l.b16 %v245
    %v381 = vunpack.c.l.b16 %v246
    %v382 = vunpack.c.l.b16 %v247
    %v383 = vunpack.c.l.b16 %v248
    %v384 = vunpack.c.l.b16 %v249
    %v385 = vunpack.c.l.b16 %v250
    %v386 = vunpack.c.l.b16 %v251
    %v387 = vunpack.c.l.b16 %v252
    %v388 = vunpack.c.l.b16 %v253
    %v389 = vunpack.c.l.b16 %v254
    %v390 = vunpack.c.l.b16 %v255
    %v391 = vunpack.c.l.b16 %v256
    %v392 = vunpack.c.l.b16 %v257
    %v393 = vunpack.c.l.b16 %v258
    %v394 = vunpack.c.l.b16 %v259
    %v395 = vunpack.c.l.b16 %v260
    %v396 = vunpack.c.l.b16 %v261
    %v397 = vunpack.c.l.b16 %v262
    %v398 = vunpack.c.l.b16 %v263
    %v399 = vunpack.c.l.b16 %v264
    %v400 = vunpack.c.l.b16 %v265
    %v401 = vunpack.c.l.b16 %v266
    %v402 = vunpack.c.l.b16 %v267
    %v403 = vunpack.c.l.b16 %v268
    %v404 = vunpack.c.l.b16 %v269
    %v405 = vunpack.c.l.b16 %v270
    %v406 = vunpack.c.l.b16 %v271
    %v407 = vunpack.c.l.b16 %v272
    %v408 = vunpack.c.l.b16 %v273
    %v409 = vunpack.c.l.b16 %v274
    %v410 = vunpack.c.l.b16 %v275
    %v411 = vunpack.c.l.b16 %v276
    %v412 = vunpack.c.l.b16 %v277
    %v413 = vunpack.c.l.b16 %v278
    %v414 = vunpack.c.l.b16 %v279
    %v415 = vpack.c.b16 %v352, %v351
    %v416 = vpack.c.b16 %v354, %v353
    %v417 = vpack.c.b16 %v356, %v355
    %v418 = vpack.c.b16 %v358, %v357
    %v419 = vpack.c.b16 %v360, %v359
    %v420 = vpack.c.b16 %v362, %v361
    %v421 = vpack.c.b16 %v364, %v363
    %v422 = vpack.c.b16 %v366, %v365
    %v423 = vpack.c.b16 %v368, %v367
    %v424 = vpack.c.b16 %v370, %v369
    %v425 = vpack.c.b16 %v372, %v371
    %v426 = vpack.c.b16 %v374, %v373
    %v427 = vpack.c.b16 %v376, %v375
    %v428 = vpack.c.b16 %v378, %v377
    %v429 = vpack.c.b16 %v380, %v379
    %v430 = vpack.c.b16 %v382, %v381
    %v431 = vpack.c.b16 %v384, %v383
    %v432 = vpack.c.b16 %v386, %v385
    %v433 = vpack.c.b16 %v388, %v387
    %v434 = vpack.c.b16 %v390, %v389
    %v435 = vpack.c.b16 %v392, %v391
    %v436 = vpack.c.b16 %v394, %v393
    %v437 = vpack.c.b16 %v396, %v395
    %v438 = vpack.c.b16 %v398, %v397
    %v439 = vpack.c.b16 %v400, %v399
    %v440 = vpack.c.b16 %v402, %v401
    %v441 = vpack.c.b16 %v404, %v403
    %v442 = vpack.c.b16 %v406, %v405
    %v443 = vpack.c.b16 %v408, %v407
    %v444 = vpack.c.b16 %v410, %v409
    %v445 = vpack.c.b16 %v412, %v411
    %v446 = vpack.c.b16 %v414, %v413
    %479 = vmatprep.subr.bf16.mxu0 0
    %480 = vmatpush1.bf16.msra.mxu0 %v415
    %481 = vmatprep.subr.bf16.mxu0 0
    %482 = vmatpush1.bf16.msra.mxu0 %v416
    %483 = vmatprep.subr.bf16.mxu0 0
    %484 = vmatpush1.bf16.msra.mxu0 %v417
    %485 = vmatprep.subr.bf16.mxu0 0
    %486 = vmatpush1.bf16.msra.mxu0 %v418
    %487 = vmatprep.subr.bf16.mxu0 0
    %488 = vmatpush1.bf16.msra.mxu0 %v419
    %489 = vmatprep.subr.bf16.mxu0 0
    %490 = vmatpush1.bf16.msra.mxu0 %v420
    %491 = vmatprep.subr.bf16.mxu0 0
    %492 = vmatpush1.bf16.msra.mxu0 %v421
    %493 = vmatprep.subr.bf16.mxu0 0
    %494 = vmatpush1.bf16.msra.mxu0 %v422
    %495 = vmatprep.subr.bf16.mxu0 0
    %496 = vmatpush1.bf16.msra.mxu0 %v423
    %497 = vmatprep.subr.bf16.mxu0 0
    %498 = vmatpush1.bf16.msra.mxu0 %v424
    %499 = vmatprep.subr.bf16.mxu0 0
    %500 = vmatpush1.bf16.msra.mxu0 %v425
    %501 = vmatprep.subr.bf16.mxu0 0
    %502 = vmatpush1.bf16.msra.mxu0 %v426
    %503 = vmatprep.subr.bf16.mxu0 0
    %504 = vmatpush1.bf16.msra.mxu0 %v427
    %505 = vmatprep.subr.bf16.mxu0 0
    %506 = vmatpush1.bf16.msra.mxu0 %v428
    %507 = vmatprep.subr.bf16.mxu0 0
    %508 = vmatpush1.bf16.msra.mxu0 %v429
    %509 = vmatprep.subr.bf16.mxu0 0
    %510 = vmatpush1.bf16.msra.mxu0 %v430
    %511 = vmatprep.mubr.bf16.mxu0 %v213
    %512 = vmatmul.mubr.bf16.gmra.mrb[0].mxu0 %v212
    %v513 = vpop.f32.mrb[0].mxu0
    %v514 = vadd.f32 %v285, %v513
    %v515 = vpop.f32.mrb[0].mxu0
    %v516 = vpop.f32.mrb[0].mxu0
    %v517 = vadd.f32 %v285, %v516
    %v518 = vpop.f32.mrb[0].mxu0
    %519 = vdwg.mxu0
    %520 = vmatprep.subr.bf16.mxu0 0
    %521 = vmatpush1.bf16.msra.mxu0 %v431
    %522 = vmatprep.subr.bf16.mxu0 0
    %523 = vmatpush1.bf16.msra.mxu0 %v432
    %524 = vmatprep.subr.bf16.mxu0 0
    %525 = vmatpush1.bf16.msra.mxu0 %v433
    %526 = vmatprep.subr.bf16.mxu0 0
    %527 = vmatpush1.bf16.msra.mxu0 %v434
    %528 = vmatprep.subr.bf16.mxu0 0
    %529 = vmatpush1.bf16.msra.mxu0 %v435
    %530 = vmatprep.subr.bf16.mxu0 0
    %531 = vmatpush1.bf16.msra.mxu0 %v436
    %532 = vmatprep.subr.bf16.mxu0 0
    %533 = vmatpush1.bf16.msra.mxu0 %v437
    %534 = vmatprep.subr.bf16.mxu0 0
    %535 = vmatpush1.bf16.msra.mxu0 %v438
    %536 = vmatprep.subr.bf16.mxu0 0
    %537 = vmatpush1.bf16.msra.mxu0 %v439
    %538 = vmatprep.subr.bf16.mxu0 0
    %539 = vmatpush1.bf16.msra.mxu0 %v440
    %540 = vmatprep.subr.bf16.mxu0 0
    %541 = vmatpush1.bf16.msra.mxu0 %v441
    %542 = vmatprep.subr.bf16.mxu0 0
    %543 = vmatpush1.bf16.msra.mxu0 %v442
    %544 = vmatprep.subr.bf16.mxu0 0
    %545 = vmatpush1.bf16.msra.mxu0 %v443
    %546 = vmatprep.subr.bf16.mxu0 0
    %547 = vmatpush1.bf16.msra.mxu0 %v444
    %548 = vmatprep.subr.bf16.mxu0 0
    %549 = vmatpush1.bf16.msra.mxu0 %v445
    %550 = vmatprep.subr.bf16.mxu0 0
    %551 = vmatpush1.bf16.msra.mxu0 %v446
    %552 = vmatprep.mubr.bf16.mxu0 %v215
    %553 = vmatmul.mubr.bf16.gmra.mrb[0].mxu0 %v214
    %v554 = vpop.f32.mrb[0].mxu0
    %v555 = vadd.f32 %v514, %v554
    %v556 = vpop.f32.mrb[0].mxu0
    %v557 = vpop.f32.mrb[0].mxu0
    %v558 = vadd.f32 %v517, %v557
    %v559 = vpop.f32.mrb[0].mxu0
    %560 = vdwg.mxu0
    %vm561 = vcmask 64512
    %562 = vst.msk [vmem:[#allocation8] sm:$0xff] %vm561, %v555
    %563 = vst.msk [vmem:[#allocation8 + $0x8] sm:$0xff] %vm561, %v558
    %566 = vrot.lane.b32.xlu0 %v555, 120
    %v567 = vpop.permute.xlu0 %566
    %568 = vrot.lane.b32.xlu0 %v558, 120
    %v569 = vpop.permute.xlu0 %568
    %vm572 = vcmask 7168
    %573 = vst.msk [vmem:[#allocation9] sm:$0xff] %vm572, %v567
    %574 = vst.msk [vmem:[#allocation9 + $0x8] sm:$0xff] %vm572, %v569
    // Predicated region
    $region34: #{tpu_custom_call.1} parent=1 // pred_check
      _
    $region35: #{tpu_custom_call.1} parent=1 // pred_check_branch
      %576 = sbr.rel (0) target = $region37
    $region36: #{tpu_custom_call.1} parent=1 // pred_region
      %s578 = ssub.s32 256, 32
      %579 = vsyncadd [#allocation4], %s578
      %s580 = sshll.u32 [#allocation8], 4
      %s581 = int_to_ptr.vmem [resolvable:$true] %s580
      %586 = dma.vmem_to_hbm [thread:$0]  %s581, 32, %s5, [#allocation4], 32, 32, 2
    $region37: #{tpu_custom_call.1} parent=1 // pred_fallthru
      _
    // Predicated region
    $region38: #{tpu_custom_call.1} parent=1 // pred_check
      _
    $region39: #{tpu_custom_call.1} parent=1 // pred_check_branch
      %588 = sbr.rel (0) target = $region41
    $region40: #{tpu_custom_call.1} parent=1 // pred_region
      // Predicated region
      $region42: #{tpu_custom_call.1} parent=40 // pred_check
        _
      $region43: #{tpu_custom_call.1} parent=40 // pred_check_branch
        %590 = sbr.rel (0) target = $region45
      $region44: #{tpu_custom_call.1} parent=40 // pred_region
        // Predicated region
        $region46: #{tpu_custom_call.1} parent=44 // pred_check
          _
        $region47: #{tpu_custom_call.1} parent=44 // pred_check_branch
          %592 = sbr.rel target = $region49
        $region48: #{tpu_custom_call.1} parent=44 // pred_region
          // Predicated region
          $region61: #{tpu_custom_call.1} parent=48 // pred_check
            _
          $region62: #{tpu_custom_call.1} parent=48 // pred_check_branch
            %607 = sbr.rel (0) target = $region64
          $region63: #{tpu_custom_call.1} parent=48 // pred_region
            loop: start=0, step=1, limit=1
            $region65: #{tpu_custom_call.1} parent=63 // loop_pre_header
              _
            $region66: #{tpu_custom_call.1} parent=63 // loop_header
              %s610 = sphi 0, %s614
              %p611 = scmp.ge.s32.totalorder %s610, 1
              %s615 = sphi [#allocation9], [#allocation9]
              %s616 = sphi %s6, %s6
            $region67: #{tpu_custom_call.1} parent=63 // loop_header_branch
              %613 = sbr.rel (%p611) target = $region71
            $region68: #{tpu_custom_call.1} parent=63 // loop_body
              %v617 = vld [vmem:[%s615] sm:$0x3]
              %618 = vst [vmem:[%s616] sm:$0x3] %v617
            $region69: #{tpu_custom_call.1} parent=63 // loop_footer
              %s614 = sadd.s32 1, %s610
            $region70: #{tpu_custom_call.1} parent=63 // loop_footer_branch
              %609 = sbr.rel target = $region66
            $region71: #{tpu_custom_call.1} parent=63 // loop_exit
              _
          $region64: #{tpu_custom_call.1} parent=48 // pred_fallthru
            _
        $region49: #{tpu_custom_call.1} parent=44 // pred_fallthru
          _
        // Predicated region
        $region50: #{tpu_custom_call.1} parent=44 // pred_check
          _
        $region51: #{tpu_custom_call.1} parent=44 // pred_check_branch
          %594 = sbr.rel (0) target = $region53
        $region52: #{tpu_custom_call.1} parent=44 // pred_region
          loop: start=0, step=1, limit=1
          $region54: #{tpu_custom_call.1} parent=52 // loop_pre_header
            _
          $region55: #{tpu_custom_call.1} parent=52 // loop_header
            %s597 = sphi 0, %s601
            %p598 = scmp.ge.s32.totalorder %s597, 1
            %s602 = sphi [#allocation9], [#allocation9]
            %s603 = sphi %s6, %s6
          $region56: #{tpu_custom_call.1} parent=52 // loop_header_branch
            %600 = sbr.rel (%p598) target = $region60
          $region57: #{tpu_custom_call.1} parent=52 // loop_body
            %v604 = vld [vmem:[%s602] sm:$0x3]
            %605 = vst [vmem:[%s603] sm:$0x3] %v604
          $region58: #{tpu_custom_call.1} parent=52 // loop_footer
            %s601 = sadd.s32 1, %s597
          $region59: #{tpu_custom_call.1} parent=52 // loop_footer_branch
            %596 = sbr.rel target = $region55
          $region60: #{tpu_custom_call.1} parent=52 // loop_exit
            _
        $region53: #{tpu_custom_call.1} parent=44 // pred_fallthru
          _
      $region45: #{tpu_custom_call.1} parent=40 // pred_fallthru
        _
      %619 = vnop
    $region41: #{tpu_custom_call.1} parent=1 // pred_fallthru
      _
    // Predicated region
    $region72: #{tpu_custom_call.1} parent=1 // pred_check
      _
    $region73: #{tpu_custom_call.1} parent=1 // pred_check_branch
      %621 = sbr.rel (0) target = $region75
    $region74: #{tpu_custom_call.1} parent=1 // pred_region
      %622 = dma.done [#allocation4], 256
    $region75: #{tpu_custom_call.1} parent=1 // pred_fallthru
      _
    // Predicated region
    $region76: #{tpu_custom_call.1} parent=1 // pred_check
      _
    $region77: #{tpu_custom_call.1} parent=1 // pred_check_branch
      %624 = sbr.rel (0) target = $region79
    $region78: #{tpu_custom_call.1} parent=1 // pred_region
      _
    $region79: #{tpu_custom_call.1} parent=1 // pred_fallthru
      _
    %625 = vsyncpa [#allocation3], 1
    %626 = vsyncpa [#allocation6], 1
    %627 = vsyncpa [#allocation4], 1

</llo_original>
